<compile_context>
chip_gen: v7x
topology: tpu7x:2x2x1
jax: 0.10.0
libtpu: 0.0.40
codegen_flags: <defaults>
</compile_context>

<pallas_src>
import functools

import jax
import jax.numpy as jnp
from jax.experimental import pallas as pl
from jax.experimental.pallas import tpu as pltpu


def _cdiv(a, b):
    return -(-a // b)


def _round_up(a, m):
    return _cdiv(a, m) * m


def _vmem_capacity_bytes():
    try:
        cap = getattr(pltpu.get_tpu_info(), "vmem_capacity_bytes", None)
        if cap:
            return int(cap)
    except Exception:
        pass
    return 128 << 20  # conservative default (v5e/v6e)


# --------------------- fused single-pass kernel (grid over batch blocks) -----


def _se_fused_kernel(x_ref, w1t_ref, b1_ref, w2t_ref, b2_ref, o_ref, *, inv_hw):
    # x block: (nb, C, HW) in the input dtype.  f32 accumulation for the pool and
    # the two 1x1-conv matmuls; the broadcast scale is done in the input dtype so
    # no block-sized f32 temporary is ever materialized.
    pooled = jnp.sum(x_ref[...], axis=2, dtype=jnp.float32) * inv_hw          # (nb, C)
    h = jnp.dot(pooled, w1t_ref[...], preferred_element_type=jnp.float32) + b1_ref[...]
    h = jnp.maximum(h, 0.0)
    y = jnp.dot(h, w2t_ref[...], preferred_element_type=jnp.float32) + b2_ref[...]
    # NOTE: a partial last batch block holds garbage rows -> garbage rows of y;
    # harmless because the corresponding output rows are masked on store.
    o_ref[...] = x_ref[...] * y.astype(o_ref.dtype)[:, :, None]


# --------------------- two-pass variant (grid over (batch, HW) tiles) --------


def _se_pool_fc_kernel(x_ref, w1t_ref, b1_ref, w2t_ref, b2_ref, y_ref, *,
                       inv_hw, hw, hw_tile, need_mask):
    hw_i = pl.program_id(1)

    @pl.when(hw_i == 0)
    def _init():
        y_ref[...] = jnp.zeros_like(y_ref)

    x = x_ref[...]
    if need_mask:  # last HW tile may be partial: zero the padded (garbage) lanes
        pos = hw_i * hw_tile + jax.lax.broadcasted_iota(jnp.int32, x.shape, 2)
        x = jnp.where(pos < hw, x, jnp.zeros_like(x))
    y_ref[...] += jnp.sum(x, axis=2, dtype=jnp.float32)                       # (nb, C)

    @pl.when(hw_i == pl.num_programs(1) - 1)
    def _finalize():
        pooled = y_ref[...] * inv_hw
        h = jnp.dot(pooled, w1t_ref[...], preferred_element_type=jnp.float32) + b1_ref[...]
        h = jnp.maximum(h, 0.0)
        y_ref[...] = jnp.dot(h, w2t_ref[...], preferred_element_type=jnp.float32) + b2_ref[...]


def _se_scale_kernel(x_ref, y_ref, o_ref):
    o_ref[...] = x_ref[...] * y_ref[...].astype(o_ref.dtype)[:, :, None]


# --------------------- wrapper ------------------------------------------------


def se_module(x_nchw, w1, b1, w2, b2, *, force_two_pass=False):
    """x: (N,C,H,W); w1: (Cr,C,1,1); b1: (Cr,); w2: (C,Cr,1,1); b2: (C,)."""
    N, C, H, W = x_nchw.shape
    Cr = w1.shape[0]
    HW = H * W
    itemsize = jnp.dtype(x_nchw.dtype).itemsize
    inv_hw = 1.0 / HW

    # Natural layout (N, C, HW): free reshape, no extra HBM copies.
    x = x_nchw.reshape(N, C, HW)

    # 1x1 convs == channel matmuls; pre-transpose, f32 params.
    w1t = w1.reshape(Cr, C).T.astype(jnp.float32)        # (C, Cr)
    w2t = w2.reshape(C, Cr).T.astype(jnp.float32)        # (Cr, C)
    b1_2d = b1.reshape(1, Cr).astype(jnp.float32)
    b2_2d = b2.reshape(1, C).astype(jnp.float32)
    weight_bytes = (w1t.size + w2t.size + b1_2d.size + b2_2d.size) * 4

    # Chip-aware VMEM budget (v7x: 64 MiB/TC -> cap ~48 MiB; v5e/v6e: 128 MiB -> 96 MiB).
    vmem_cap = _vmem_capacity_bytes()
    vmem_limit_cap = min((vmem_cap * 3) // 4, 96 << 20)
    slack = 4 << 20
    block_budget = max(vmem_limit_cap - 2 * weight_bytes - slack, 1 << 20)

    sample_bytes = C * HW * itemsize
    # Footprint per step: 2 buffers x (input block + output block), all in the
    # input dtype (the kernel keeps no block-sized f32 temporaries).
    nb_budget = block_budget // (4 * sample_bytes)
    # >= 4 grid steps when the batch allows it (>= 2 per TC on v7x + pipelining).
    nb_step_cap = max(1, N // 4) if N >= 4 else 1

    use_two_pass = force_two_pass or nb_budget < 1 or (N < 4 and HW >= 256)

    if not use_two_pass:
        # -------- fused single pass: grid over batch blocks --------
        nb = int(max(1, min(nb_budget, nb_step_cap, N)))
        grid = (_cdiv(N, nb),)
        vmem_needed = 4 * nb * sample_bytes + 2 * weight_bytes + (2 << 20)
        vmem_limit = int(min(max(vmem_needed, 32 << 20), vmem_limit_cap))
        cost = pl.CostEstimate(
            flops=3 * N * C * HW + 4 * N * C * Cr,
            transcendentals=0,
            bytes_accessed=2 * N * C * HW * itemsize + weight_bytes,
        )
        out = pl.pallas_call(
            functools.partial(_se_fused_kernel, inv_hw=inv_hw),
            out_shape=jax.ShapeDtypeStruct(x.shape, x.dtype),
            grid_spec=pltpu.PrefetchScalarGridSpec(
                num_scalar_prefetch=0,
                grid=grid,
                in_specs=[
                    pl.BlockSpec((nb, C, HW), lambda n: (n, 0, 0)),
                    pl.BlockSpec((C, Cr), lambda n: (0, 0)),
                    pl.BlockSpec((1, Cr), lambda n: (0, 0)),
                    pl.BlockSpec((Cr, C), lambda n: (0, 0)),
                    pl.BlockSpec((1, C), lambda n: (0, 0)),
                ],
                out_specs=pl.BlockSpec((nb, C, HW), lambda n: (n, 0, 0)),
            ),
            compiler_params=pltpu.CompilerParams(
                dimension_semantics=("parallel",),
                vmem_limit_bytes=vmem_limit),
            cost_estimate=cost,
        )(x, w1t, b1_2d, w2t, b2_2d)
        return out.reshape(N, C, H, W)

    # -------- two-pass: (1) pool + fc over (N, HW) tiles, (2) broadcast scale --------
    nb2 = N if N <= 8 else 8              # keeps the (nb2, C) pooled block layout-legal
    n_blocks = _cdiv(N, nb2)
    if HW <= 128:
        hw_tile = HW
    else:
        tile_budget = max(128, (block_budget // (4 * nb2 * C * itemsize)) // 128 * 128)
        desired_hw_blocks = max(2, _cdiv(4, n_blocks))
        tile_steps = _round_up(_cdiv(HW, desired_hw_blocks), 128)
        hw_tile = int(min(tile_budget, tile_steps, _round_up(HW, 128)))
        if hw_tile >= HW:
            hw_tile = HW
    hw_blocks = _cdiv(HW, hw_tile)
    need_mask = (HW % hw_tile) != 0
    grid = (n_blocks, hw_blocks)

    tile_bytes = nb2 * C * hw_tile * itemsize
    y_bytes = nb2 * C * 4
    vmem_needed = 4 * tile_bytes + 2 * (weight_bytes + y_bytes) + (2 << 20)
    vmem_limit = int(min(max(vmem_needed, 32 << 20), vmem_limit_cap))

    pool_cost = pl.CostEstimate(
        flops=N * C * HW + 4 * N * C * Cr,
        transcendentals=0,
        bytes_accessed=N * C * HW * itemsize + weight_bytes + N * C * 4,
    )
    y = pl.pallas_call(
        functools.partial(_se_pool_fc_kernel, inv_hw=inv_hw, hw=HW,
                          hw_tile=hw_tile, need_mask=need_mask),
        out_shape=jax.ShapeDtypeStruct((N, C), jnp.float32),
        grid_spec=pltpu.PrefetchScalarGridSpec(
            num_scalar_prefetch=0,
            grid=grid,
            in_specs=[
                pl.BlockSpec((nb2, C, hw_tile), lambda n, h: (n, 0, h)),
                pl.BlockSpec((C, Cr), lambda n, h: (0, 0)),
                pl.BlockSpec((1, Cr), lambda n, h: (0, 0)),
                pl.BlockSpec((Cr, C), lambda n, h: (0, 0)),
                pl.BlockSpec((1, C), lambda n, h: (0, 0)),
            ],
            out_specs=pl.BlockSpec((nb2, C), lambda n, h: (n, 0)),
        ),
        compiler_params=pltpu.CompilerParams(
            dimension_semantics=("parallel", "arbitrary"),
            vmem_limit_bytes=vmem_limit),
        cost_estimate=pool_cost,
    )(x, w1t, b1_2d, w2t, b2_2d)

    scale_cost = pl.CostEstimate(
        flops=N * C * HW,
        transcendentals=0,
        bytes_accessed=2 * N * C * HW * itemsize + N * C * 4,
    )
    out = pl.pallas_call(
        _se_scale_kernel,
        out_shape=jax.ShapeDtypeStruct(x.shape, x.dtype),
        grid_spec=pltpu.PrefetchScalarGridSpec(
            num_scalar_prefetch=0,
            grid=grid,
            in_specs=[
                pl.BlockSpec((nb2, C, hw_tile), lambda n, h: (n, 0, h)),
                pl.BlockSpec((nb2, C), lambda n, h: (n, 0)),
            ],
            out_specs=pl.BlockSpec((nb2, C, hw_tile), lambda n, h: (n, 0, h)),
        ),
        compiler_params=pltpu.CompilerParams(
            dimension_semantics=("parallel", "parallel"),
            vmem_limit_bytes=vmem_limit),
        cost_estimate=scale_cost,
    )(x, y)
    return out.reshape(N, C, H, W)


def se_module_ref(x, w1, b1, w2, b2):
    # pure-JAX reference mirroring the PyTorch forward
    pooled = jnp.mean(x.astype(jnp.float32), axis=(2, 3))                    # (N, C)
    h = jnp.maximum(pooled @ w1.reshape(w1.shape[0], -1).T.astype(jnp.float32)
                    + b1.astype(jnp.float32), 0.0)
    y = h @ w2.reshape(w2.shape[0], -1).T.astype(jnp.float32) + b2.astype(jnp.float32)
    return (x.astype(jnp.float32) * y[:, :, None, None]).astype(x.dtype)


def _make_params(key, N, C, H, W, reduction):
    Cr = C // reduction
    k1, k2, k3, k4, k5 = jax.random.split(key, 5)
    x = jax.random.normal(k1, (N, C, H, W), dtype=jnp.float32)
    w1 = jax.random.normal(k2, (Cr, C, 1, 1), dtype=jnp.float32) * 0.05
    b1 = jax.random.normal(k3, (Cr,), dtype=jnp.float32) * 0.05
    w2 = jax.random.normal(k4, (C, Cr, 1, 1), dtype=jnp.float32) * 0.05
    b2 = jax.random.normal(k5, (C,), dtype=jnp.float32) * 0.05
    return x, w1, b1, w2, b2


if __name__ == "__main__":
    root = jax.random.PRNGKey(0)
    kA, kB, kC = jax.random.split(root, 3)

    # Test 1: small spec shape (N=2, C=4, 16x16) -> tiny batch / HW>=256 ->
    # two-pass (pool+fc then scale) path with HW tiling.
    x, w1, b1, w2, b2 = _make_params(kA, 2, 4, 16, 16, reduction=1)
    out = se_module(x, w1, b1, w2, b2)
    jax.block_until_ready(out)
    ref = se_module_ref(x, w1, b1, w2, b2)
    assert out.shape == x.shape
    assert jnp.allclose(out, ref, atol=1e-4, rtol=1e-4)

    # Test 2: SE-like shape (C=128, HW=49) -> fused single-pass path.
    x2, w1b, b1b, w2b, b2b = _make_params(kB, 2, 128, 7, 7, reduction=4)
    out2 = se_module(x2, w1b, b1b, w2b, b2b)
    jax.block_until_ready(out2)
    ref2 = se_module_ref(x2, w1b, b1b, w2b, b2b)
    assert out2.shape == x2.shape
    assert jnp.allclose(out2, ref2, atol=1e-4, rtol=1e-4)

    # Test 3: non-128-divisible HW with forced two-pass -> exercises the masked
    # partial-HW-tile pooling path.
    x3, w1c, b1c, w2c, b2c = _make_params(kC, 3, 8, 12, 17, reduction=2)
    out3 = se_module(x3, w1c, b1c, w2c, b2c, force_two_pass=True)
    jax.block_until_ready(out3)
    ref3 = se_module_ref(x3, w1c, b1c, w2c, b2c)
    assert out3.shape == x3.shape
    assert jnp.allclose(out3, ref3, atol=1e-4, rtol=1e-4)

    print("KERNEL_OK")
</pallas_src>

<mosaic_0001>
module attributes {stable_mosaic.version = 11 : i64} {
  func.func @_se_pool_fc_kernel(%arg0: i32, %arg1: i32, %arg2: memref<2x4x128xf32, #tpu.memory_space<vmem>>, %arg3: memref<4x4xf32, #tpu.memory_space<vmem>>, %arg4: memref<1x4xf32, #tpu.memory_space<vmem>>, %arg5: memref<4x4xf32, #tpu.memory_space<vmem>>, %arg6: memref<1x4xf32, #tpu.memory_space<vmem>>, %arg7: memref<2x4xf32, #tpu.memory_space<vmem>>) attributes {dimension_semantics = [#tpu.dimension_semantics<parallel>, #tpu.dimension_semantics<arbitrary>], iteration_bounds = array<i64: 1, 2>, scalar_prefetch = 0 : i64, scratch_operands = 0 : i64, tpu.core_type = #tpu.core_type<tc>, window_params = [{transform_indices = @transform_0, window_bounds = array<i64: 2, 4, 128>}, {pipeline_mode = #tpu.pipeline_mode<synchronous>, transform_indices = @transform_1, window_bounds = array<i64: 4, 4>}, {pipeline_mode = #tpu.pipeline_mode<synchronous>, transform_indices = @transform_2, window_bounds = array<i64: 1, 4>}, {pipeline_mode = #tpu.pipeline_mode<synchronous>, transform_indices = @transform_3, window_bounds = array<i64: 4, 4>}, {pipeline_mode = #tpu.pipeline_mode<synchronous>, transform_indices = @transform_4, window_bounds = array<i64: 1, 4>}, {transform_indices = @transform_5, window_bounds = array<i64: 2, 4>}]} {
    %c0_i32 = arith.constant 0 : i32
    %0 = arith.cmpi eq, %arg1, %c0_i32 : i32
    %1 = arith.extui %0 : i1 to i32
    %c0_i32_0 = arith.constant 0 : i32
    %2 = arith.cmpi ne, %1, %c0_i32_0 : i32
    scf.if %2 {
      %cst_8 = arith.constant 0.000000e+00 : f32
      %11 = vector.broadcast %cst_8 : f32 to vector<2x4xf32>
      %c0_9 = arith.constant 0 : index
      %c0_10 = arith.constant 0 : index
      %12 = vector.load %arg7[%c0_9, %c0_10] : memref<2x4xf32, #tpu.memory_space<vmem>>, vector<2x4xf32>
      tpu.vector_store %arg7[%c0_9, %c0_10], %11 {strides = array<i32>} : memref<2x4xf32, #tpu.memory_space<vmem>>, vector<2x4xf32>,
    } else {
    }
    %c0 = arith.constant 0 : index
    %c0_1 = arith.constant 0 : index
    %c0_2 = arith.constant 0 : index
    %3 = vector.load %arg2[%c0, %c0_1, %c0_2] : memref<2x4x128xf32, #tpu.memory_space<vmem>>, vector<2x4x128xf32>
    %c0_3 = arith.constant 0 : index
    %c0_4 = arith.constant 0 : index
    %4 = vector.load %arg7[%c0_3, %c0_4] : memref<2x4xf32, #tpu.memory_space<vmem>>, vector<2x4xf32>
    %cst = arith.constant dense<0.000000e+00> : vector<2x4xf32>
    %5 = vector.multi_reduction <add>, %3, %cst [2] : vector<2x4x128xf32> to vector<2x4xf32>
    %6 = arith.addf %4, %5 : vector<2x4xf32>
    %c0_5 = arith.constant 0 : index
    %c0_6 = arith.constant 0 : index
    %7 = vector.load %arg7[%c0_5, %c0_6] : memref<2x4xf32, #tpu.memory_space<vmem>>, vector<2x4xf32>
    tpu.vector_store %arg7[%c0_5, %c0_6], %6 {strides = array<i32>} : memref<2x4xf32, #tpu.memory_space<vmem>>, vector<2x4xf32>,
    %c1_i32 = arith.constant 1 : i32
    %8 = arith.cmpi eq, %arg1, %c1_i32 : i32
    %9 = arith.extui %8 : i1 to i32
    %c0_i32_7 = arith.constant 0 : i32
    %10 = arith.cmpi ne, %9, %c0_i32_7 : i32
    scf.if %10 {
      %c0_8 = arith.constant 0 : index
      %c0_9 = arith.constant 0 : index
      %11 = vector.load %arg7[%c0_8, %c0_9] : memref<2x4xf32, #tpu.memory_space<vmem>>, vector<2x4xf32>
      %cst_10 = arith.constant 3.906250e-03 : f32
      %12 = vector.broadcast %cst_10 : f32 to vector<2x4xf32>
      %13 = arith.mulf %11, %12 : vector<2x4xf32>
      %c0_11 = arith.constant 0 : index
      %c0_12 = arith.constant 0 : index
      %14 = vector.load %arg3[%c0_11, %c0_12] : memref<4x4xf32, #tpu.memory_space<vmem>>, vector<4x4xf32>
      %cst_13 = arith.constant dense<0.000000e+00> : vector<2x4xf32>
      %15 = tpu.matmul %13, %14, %cst_13 {dimension_numbers = #tpu.dot_dimension_numbers<[1], [0], [0], [1], [0, 0, 1, 1], [], []>} : vector<2x4xf32>, vector<4x4xf32>, vector<2x4xf32> -> vector<2x4xf32>
      %c0_14 = arith.constant 0 : index
      %c0_15 = arith.constant 0 : index
      %16 = vector.load %arg4[%c0_14, %c0_15] : memref<1x4xf32, #tpu.memory_space<vmem>>, vector<1x4xf32>
      %17 = vector.broadcast %16 : vector<1x4xf32> to vector<2x4xf32>
      %18 = arith.addf %15, %17 : vector<2x4xf32>
      %cst_16 = arith.constant 0.000000e+00 : f32
      %19 = vector.broadcast %cst_16 : f32 to vector<2x4xf32>
      %20 = arith.maximumf %18, %19 : vector<2x4xf32>
      %c0_17 = arith.constant 0 : index
      %c0_18 = arith.constant 0 : index
      %21 = vector.load %arg5[%c0_17, %c0_18] : memref<4x4xf32, #tpu.memory_space<vmem>>, vector<4x4xf32>
      %cst_19 = arith.constant dense<0.000000e+00> : vector<2x4xf32>
      %22 = tpu.matmul %20, %21, %cst_19 {dimension_numbers = #tpu.dot_dimension_numbers<[1], [0], [0], [1], [0, 0, 1, 1], [], []>} : vector<2x4xf32>, vector<4x4xf32>, vector<2x4xf32> -> vector<2x4xf32>
      %c0_20 = arith.constant 0 : index
      %c0_21 = arith.constant 0 : index
      %23 = vector.load %arg6[%c0_20, %c0_21] : memref<1x4xf32, #tpu.memory_space<vmem>>, vector<1x4xf32>
      %24 = vector.broadcast %23 : vector<1x4xf32> to vector<2x4xf32>
      %25 = arith.addf %22, %24 : vector<2x4xf32>
      %c0_22 = arith.constant 0 : index
      %c0_23 = arith.constant 0 : index
      %26 = vector.load %arg7[%c0_22, %c0_23] : memref<2x4xf32, #tpu.memory_space<vmem>>, vector<2x4xf32>
      tpu.vector_store %arg7[%c0_22, %c0_23], %25 {strides = array<i32>} : memref<2x4xf32, #tpu.memory_space<vmem>>, vector<2x4xf32>,
    } else {
    }
    return
  }
  func.func @transform_0(%arg0: i32, %arg1: i32) -> (i32, i32, i32) {
    %c0_i32 = arith.constant 0 : i32
    %c0_i32_0 = arith.constant 0 : i32
    return %arg0, %c0_i32, %arg1 : i32, i32, i32
  }
  func.func @transform_1(%arg0: i32, %arg1: i32) -> (i32, i32) {
    %c0_i32 = arith.constant 0 : i32
    %c0_i32_0 = arith.constant 0 : i32
    %c0_i32_1 = arith.constant 0 : i32
    return %c0_i32, %c0_i32_0 : i32, i32
  }
  func.func @transform_2(%arg0: i32, %arg1: i32) -> (i32, i32) {
    %c0_i32 = arith.constant 0 : i32
    %c0_i32_0 = arith.constant 0 : i32
    %c0_i32_1 = arith.constant 0 : i32
    return %c0_i32, %c0_i32_0 : i32, i32
  }
  func.func @transform_3(%arg0: i32, %arg1: i32) -> (i32, i32) {
    %c0_i32 = arith.constant 0 : i32
    %c0_i32_0 = arith.constant 0 : i32
    %c0_i32_1 = arith.constant 0 : i32
    return %c0_i32, %c0_i32_0 : i32, i32
  }
  func.func @transform_4(%arg0: i32, %arg1: i32) -> (i32, i32) {
    %c0_i32 = arith.constant 0 : i32
    %c0_i32_0 = arith.constant 0 : i32
    %c0_i32_1 = arith.constant 0 : i32
    return %c0_i32, %c0_i32_0 : i32, i32
  }
  func.func @transform_5(%arg0: i32, %arg1: i32) -> (i32, i32) {
    %c0_i32 = arith.constant 0 : i32
    %c0_i32_0 = arith.constant 0 : i32
    return %arg0, %c0_i32 : i32, i32
  }
}

</mosaic_0001>

<llo_original>
// kernel: tpu_custom_call.1
$region0: #{tpu_custom_call.1}
  #allocation0 [shape = 'u32[]', space=smem, size = 0x4, offset = 0x4, fixed_abs, tag = 'smem constant byte address 0x4 - core index']
  #allocation1 [shape = 'u32[144,128]{1,0:T(1,128)}', space=vmem, size = 0x12000, scoped, tag = 'internal scratch']
  %s0 = inlined_call_operand.hbm [shape: f32[2,4,256], index: 0, kind: input, shape index: {}]
  %s1 = inlined_call_operand.hbm [shape: f32[4,4], index: 1, kind: input, shape index: {}]
  %s2 = inlined_call_operand.vmem [shape: f32[1,4], index: 2, kind: input, shape index: {}]
  %s3 = inlined_call_operand.vmem [shape: f32[4,4], index: 3, kind: input, shape index: {}]
  %s4 = inlined_call_operand.vmem [shape: f32[1,4], index: 4, kind: input, shape index: {}]
  %s5 = inlined_call_operand.hbm [shape: f32[2,4], index: 5, kind: output, shape index: {}]
  %s6 = sld [smem:[#allocation0]]
  $region69: #{tpu_custom_call.1} parent=0
    _
  %s8 = ssub.s32 1, %s6
  %s9 = scalar_select 0, %s8, %s6
  $region1: #{tpu_custom_call.1} parent=0
    #allocation2 [shape = 'u8[8192]{0}', space=vmem, size = 0x2000, scoped, tag = 'input window, operand 0']
    #allocation3 [shape = 's32[2]{0}', space=sflag, size = 0x8, scoped, tag = 'scoped memory for tpu_custom_call.1']
    #allocation4 [shape = 's32[2]{0}', space=sflag, size = 0x8, scoped, tag = 'scoped memory for tpu_custom_call.1']
    #allocation5 [shape = 'u8[2048]{0}', space=vmem, size = 0x800, scoped, tag = 'input window, operand 1, single buffered']
    #allocation6 [shape = 's32[1]{0}', space=sflag, size = 0x4, scoped, tag = 'scoped memory for tpu_custom_call.1']
    #allocation7 [shape = 'u8[1024]{0}', space=vmem, size = 0x400, scoped, tag = 'output window, operand 0, single buffered']
    %10 = vsyncpa [#allocation3], 0
    %s11 = scalar_lea.sflag [#allocation3], 1
    %12 = vsyncpa %s11, 0
    %13 = vsyncpa [#allocation6], 0
    %14 = vsyncpa [#allocation4], 0
    loop: start=0, step=1, limit=4
    $region2: #{tpu_custom_call.1} parent=1 // loop_pre_header
      _
    $region3: #{tpu_custom_call.1} parent=1 // loop_header
      %s16 = sphi 0, %s20
      %p17 = scmp.ge.s32.totalorder %s16, 4
      %s23 = sphi 0, %s35
      %s24 = sphi 0, %s31
      %s25 = sphi 0, %s23
      %s26 = sphi 0, %s24
      %s27 = sphi 0, %s25
      %s28 = sphi 0, %s26
      %s40 = sphi 0, %s42
      %s43 = sphi 0, %s40
      %s44 = sphi 0, %s43
      %s60 = sphi 0, %s44
      %s64 = sphi 0, %s64
      %s66 = sphi 0, %s64
      %s67 = sphi 0, %s66
      %s81 = sphi 0, %s67
      %s85 = sphi 0, %s85
      %s87 = sphi 0, %s85
      %s88 = sphi 0, %s87
      %s102 = sphi 0, %s88
      %s106 = sphi 0, %s106
      %s108 = sphi 0, %s106
      %s109 = sphi 0, %s108
      %s123 = sphi 0, %s109
      %s127 = sphi 0, %s127
      %s129 = sphi 0, %s127
      %s130 = sphi 0, %s129
      %s144 = sphi 0, %s130
      %s150 = sphi 0, %s152
      %s153 = sphi 0, %s150
      %s154 = sphi 0, %s153
      %s170 = sphi 0, %s154
    $region4: #{tpu_custom_call.1} parent=1 // loop_header_branch
      %19 = sbr.rel (%p17) target = $region8
    $region5: #{tpu_custom_call.1} parent=1 // loop_body
      %s21 = ssub.s32 %s16, 1
      %s22 = ssub.s32 %s16, 2
      %s29 = sadd.s32 1, %s24
      %p30 = scmp.ge.s32.totalorder %s29, 2
      %s31 = scalar_select %p30, 0, %s29
      %s32 = sadd.s32 1, %s23
      %s33 = scalar_select %p30, %s32, %s23
      %p34 = scmp.ge.s32.totalorder %s33, 1
      %s35 = scalar_select %p34, 0, %s33
      %s36 = ssub.s32 %s23, %s35
      %s37 = ssub.s32 %s24, %s31
      %s38 = sor.u32 %s36, %s37
      %p39 = scmp.eq.s32.totalorder %s38, 0
      %s41 = sadd.s32 %s40, 1
      %s42 = scalar_select %p39, %s40, %s41
      %p45 = pneg %p39
      %p46 = scmp.eq.s32.totalorder %s16, 1
      %p47 = por %p45, %p46
      %p48 = scmp.ne.s32.totalorder %s40, %s43
      %p49 = scmp.eq.s32.totalorder %s16, 0
      %p50 = por %p48, %p49
      %p51 = scmp.ne.s32.totalorder %s40, %s43
      %p52 = scmp.eq.s32.totalorder %s21, 1
      %p53 = por %p51, %p52
      %p54 = scmp.ne.s32.totalorder %s43, %s44
      %p55 = scmp.eq.s32.totalorder %s21, 0
      %p56 = por %p54, %p55
      %p57 = scmp.ne.s32.totalorder %s43, %s44
      %p58 = scmp.eq.s32.totalorder %s22, 1
      %p59 = por %p57, %p58
      %p61 = scmp.ne.s32.totalorder %s44, %s60
      %p62 = scmp.eq.s32.totalorder %s22, 0
      %p63 = por %p61, %p62
      %s65 = sadd.s32 %s64, 1
      %p68 = scmp.eq.s32.totalorder %s16, 1
      %p69 = scmp.ne.s32.totalorder %s64, %s66
      %p70 = scmp.eq.s32.totalorder %s16, 0
      %p71 = por %p69, %p70
      %p72 = scmp.ne.s32.totalorder %s64, %s66
      %p73 = scmp.eq.s32.totalorder %s21, 1
      %p74 = por %p72, %p73
      %p75 = scmp.ne.s32.totalorder %s66, %s67
      %p76 = scmp.eq.s32.totalorder %s21, 0
      %p77 = por %p75, %p76
      %p78 = scmp.ne.s32.totalorder %s66, %s67
      %p79 = scmp.eq.s32.totalorder %s22, 1
      %p80 = por %p78, %p79
      %p82 = scmp.ne.s32.totalorder %s67, %s81
      %p83 = scmp.eq.s32.totalorder %s22, 0
      %p84 = por %p82, %p83
      %s86 = sadd.s32 %s85, 1
      %p89 = scmp.eq.s32.totalorder %s16, 1
      %p90 = scmp.ne.s32.totalorder %s85, %s87
      %p91 = scmp.eq.s32.totalorder %s16, 0
      %p92 = por %p90, %p91
      %p93 = scmp.ne.s32.totalorder %s85, %s87
      %p94 = scmp.eq.s32.totalorder %s21, 1
      %p95 = por %p93, %p94
      %p96 = scmp.ne.s32.totalorder %s87, %s88
      %p97 = scmp.eq.s32.totalorder %s21, 0
      %p98 = por %p96, %p97
      %p99 = scmp.ne.s32.totalorder %s87, %s88
      %p100 = scmp.eq.s32.totalorder %s22, 1
      %p101 = por %p99, %p100
      %p103 = scmp.ne.s32.totalorder %s88, %s102
      %p104 = scmp.eq.s32.totalorder %s22, 0
      %p105 = por %p103, %p104
      %s107 = sadd.s32 %s106, 1
      %p110 = scmp.eq.s32.totalorder %s16, 1
      %p111 = scmp.ne.s32.totalorder %s106, %s108
      %p112 = scmp.eq.s32.totalorder %s16, 0
      %p113 = por %p111, %p112
      %p114 = scmp.ne.s32.totalorder %s106, %s108
      %p115 = scmp.eq.s32.totalorder %s21, 1
      %p116 = por %p114, %p115
      %p117 = scmp.ne.s32.totalorder %s108, %s109
      %p118 = scmp.eq.s32.totalorder %s21, 0
      %p119 = por %p117, %p118
      %p120 = scmp.ne.s32.totalorder %s108, %s109
      %p121 = scmp.eq.s32.totalorder %s22, 1
      %p122 = por %p120, %p121
      %p124 = scmp.ne.s32.totalorder %s109, %s123
      %p125 = scmp.eq.s32.totalorder %s22, 0
      %p126 = por %p124, %p125
      %s128 = sadd.s32 %s127, 1
      %p131 = scmp.eq.s32.totalorder %s16, 1
      %p132 = scmp.ne.s32.totalorder %s127, %s129
      %p133 = scmp.eq.s32.totalorder %s16, 0
      %p134 = por %p132, %p133
      %p135 = scmp.ne.s32.totalorder %s127, %s129
      %p136 = scmp.eq.s32.totalorder %s21, 1
      %p137 = por %p135, %p136
      %p138 = scmp.ne.s32.totalorder %s129, %s130
      %p139 = scmp.eq.s32.totalorder %s21, 0
      %p140 = por %p138, %p139
      %p141 = scmp.ne.s32.totalorder %s129, %s130
      %p142 = scmp.eq.s32.totalorder %s22, 1
      %p143 = por %p141, %p142
      %p145 = scmp.ne.s32.totalorder %s130, %s144
      %p146 = scmp.eq.s32.totalorder %s22, 0
      %p147 = por %p145, %p146
      %s148 = ssub.s32 %s23, %s35
      %p149 = scmp.eq.s32.totalorder %s148, 0
      %s151 = sadd.s32 %s150, 1
      %s152 = scalar_select %p149, %s150, %s151
      %p155 = pneg %p149
      %p156 = scmp.eq.s32.totalorder %s16, 1
      %p157 = por %p155, %p156
      %p158 = scmp.ne.s32.totalorder %s150, %s153
      %p159 = scmp.eq.s32.totalorder %s16, 0
      %p160 = por %p158, %p159
      %p161 = scmp.ne.s32.totalorder %s150, %s153
      %p162 = scmp.eq.s32.totalorder %s21, 1
      %p163 = por %p161, %p162
      %p164 = scmp.ne.s32.totalorder %s153, %s154
      %p165 = scmp.eq.s32.totalorder %s21, 0
      %p166 = por %p164, %p165
      %p167 = scmp.ne.s32.totalorder %s153, %s154
      %p168 = scmp.eq.s32.totalorder %s22, 1
      %p169 = por %p167, %p168
      %p171 = scmp.ne.s32.totalorder %s154, %s170
      %p172 = scmp.eq.s32.totalorder %s22, 0
      %p173 = por %p171, %p172
      %p174 = scmp.le.s32.totalorder 1, %s16
      %p175 = scmp.lt.s32.totalorder %s16, 3
      %p176 = pnand %p174, %p175
      %p177 = pneg %p176
      // Predicated region
      $region9: #{tpu_custom_call.1} parent=5 // pred_check
        _
      $region10: #{tpu_custom_call.1} parent=5 // pred_check_branch
        %179 = sbr.rel (%p176) target = $region12
      $region11: #{tpu_custom_call.1} parent=5 // pred_region
        %s180 = ssub.s32 %s16, 1
        // Predicated region
        $region13: #{tpu_custom_call.1} parent=11 // pred_check
          %p181 = pneg %p77
        $region14: #{tpu_custom_call.1} parent=11 // pred_check_branch
          %183 = sbr.rel (%p181) target = $region16
        $region15: #{tpu_custom_call.1} parent=11 // pred_region
          %s185 = ssub.s32 64, 64
          %186 = vsyncadd [#allocation6], %s185
          %s188 = sshll.u32 [#allocation5], 4
          %s189 = int_to_ptr.vmem [resolvable:$true] %s188
          %191 = dma.hbm_to_vmem [thread:$0]  %s1, 64, %s189, [#allocation6]
        $region16: #{tpu_custom_call.1} parent=11 // pred_fallthru
          _
        // Predicated region
        $region17: #{tpu_custom_call.1} parent=11 // pred_check
          %p192 = pneg %p98
        $region18: #{tpu_custom_call.1} parent=11 // pred_check_branch
          %194 = sbr.rel (%p192) target = $region20
        $region19: #{tpu_custom_call.1} parent=11 // pred_region
          _
        $region20: #{tpu_custom_call.1} parent=11 // pred_fallthru
          _
        // Predicated region
        $region21: #{tpu_custom_call.1} parent=11 // pred_check
          %p195 = pneg %p119
        $region22: #{tpu_custom_call.1} parent=11 // pred_check_branch
          %197 = sbr.rel (%p195) target = $region24
        $region23: #{tpu_custom_call.1} parent=11 // pred_region
          _
        $region24: #{tpu_custom_call.1} parent=11 // pred_fallthru
          _
        // Predicated region
        $region25: #{tpu_custom_call.1} parent=11 // pred_check
          %p198 = pneg %p140
        $region26: #{tpu_custom_call.1} parent=11 // pred_check_branch
          %200 = sbr.rel (%p198) target = $region28
        $region27: #{tpu_custom_call.1} parent=11 // pred_region
          _
        $region28: #{tpu_custom_call.1} parent=11 // pred_fallthru
          _
      $region12: #{tpu_custom_call.1} parent=5 // pred_fallthru
        _
      %p201 = scmp.lt.s32.totalorder %s16, 2
      // Predicated region
      $region29: #{tpu_custom_call.1} parent=5 // pred_check
        %p202 = pneg %p201
      $region30: #{tpu_custom_call.1} parent=5 // pred_check_branch
        %204 = sbr.rel (%p202) target = $region32
      $region31: #{tpu_custom_call.1} parent=5 // pred_region
        // Predicated region
        $region33: #{tpu_custom_call.1} parent=31 // pred_check
          %p205 = pneg %p50
        $region34: #{tpu_custom_call.1} parent=31 // pred_check_branch
          %207 = sbr.rel (%p205) target = $region36
        $region35: #{tpu_custom_call.1} parent=31 // pred_region
          %s208 = sand.u32 %s40, 1
          %s209 = scalar_lea.sflag [#allocation3], %s208
          %s210 = sand.u32 %s40, 1
          %s211 = smul.addr %s210, 8
          %s212 = scalar_lea.vmem [#allocation2], %s211
          %s213 = smul.u32 2, %s23
          %s215 = ssub.s32 128, 128
          %216 = vsyncadd %s209, %s215
          %s217 = smul.addr %s213, 2
          %s218 = sadd.s32 %s24, %s217
          %s219 = smul.addr %s218, 64
          %s220 = scalar_lea.hbm %s0, %s219
          %s221 = sshll.u32 %s212, 4
          %s222 = int_to_ptr.vmem [resolvable:$true] %s221
          %227 = dma.hbm_to_vmem [thread:$0]  %s220, 128, %s222, %s209, 128, 64, 4
        $region36: #{tpu_custom_call.1} parent=31 // pred_fallthru
          _
      $region32: #{tpu_custom_call.1} parent=5 // pred_fallthru
        _
      %p228 = scmp.le.s32.totalorder 1, %s16
      %p229 = scmp.lt.s32.totalorder %s16, 3
      %p230 = pnand %p228, %p229
      %p231 = pneg %p230
      // Predicated region
      $region37: #{tpu_custom_call.1} parent=5 // pred_check
        _
      $region38: #{tpu_custom_call.1} parent=5 // pred_check_branch
        %233 = sbr.rel (%p230) target = $region40
      $region39: #{tpu_custom_call.1} parent=5 // pred_region
        %s234 = ssub.s32 %s16, 1
        %s235 = sand.u32 %s43, 1
        %s236 = scalar_lea.sflag [#allocation3], %s235
        %s237 = sand.u32 %s43, 1
        %s238 = smul.addr %s237, 8
        %s239 = scalar_lea.vmem [#allocation2], %s238
        // Predicated region
        $region41: #{tpu_custom_call.1} parent=39 // pred_check
          %p240 = pneg %p56
        $region42: #{tpu_custom_call.1} parent=39 // pred_check_branch
          %242 = sbr.rel (%p240) target = $region44
        $region43: #{tpu_custom_call.1} parent=39 // pred_region
          %243 = dma.done %s236, 128
        $region44: #{tpu_custom_call.1} parent=39 // pred_fallthru
          _
        // Predicated region
        $region45: #{tpu_custom_call.1} parent=39 // pred_check
          %p244 = pneg %p77
        $region46: #{tpu_custom_call.1} parent=39 // pred_check_branch
          %246 = sbr.rel (%p244) target = $region48
        $region47: #{tpu_custom_call.1} parent=39 // pred_region
          %247 = dma.done [#allocation6], 64
        $region48: #{tpu_custom_call.1} parent=39 // pred_fallthru
          _
        %s248 = sand.u32 %s43, 1
        %s249 = scalar_lea.sflag [#allocation3], %s248
        %s250 = sand.u32 %s43, 1
        %s251 = smul.addr %s250, 8
        %s252 = scalar_lea.vmem [#allocation2], %s251
        %p253 = pneg %p56
        %p254 = pneg %p53
        %p255 = pneg %p77
        %p256 = pneg %p74
        %p257 = pneg %p98
        %p258 = pneg %p95
        %p259 = pneg %p119
        %p260 = pneg %p116
        %p261 = pneg %p140
        %p262 = pneg %p137
        %p263 = pneg %p166
        %p264 = pneg %p163
        %s265 = smul.u32 2, %s25
        %p266 = scmp.eq.s32.totalorder %s26, 0
        // Predicated region
        $region49: #{tpu_custom_call.1} parent=39 // pred_check
          %p267 = pneg %p266
        $region50: #{tpu_custom_call.1} parent=39 // pred_check_branch
          %269 = sbr.rel (%p267) target = $region52
        $region51: #{tpu_custom_call.1} parent=39 // pred_region
          %vm270 = vcmask 25600
          %271 = vst.msk [vmem:[#allocation7] sm:$0x3] %vm270, 0.0
        $region52: #{tpu_custom_call.1} parent=39 // pred_fallthru
          _
        %v272 = vld [vmem:[%s239] sm:$0xf]
        %v273 = vld [vmem:[%s239 + $0x4] sm:$0xf]
        %v274 = vld [vmem:[#allocation7] sm:$0x3]
        %vm275 = vcmask 1043456
        %v276 = vsel %vm275, %v272, 0.0
        %277 = vadd.xlane.f32.xlu0 %v276
        %v278 = vpop.xlane.xlu0 %277
        %v279 = vsel %vm275, %v273, 0.0
        %280 = vadd.xlane.f32.xlu0 %v279
        %v281 = vpop.xlane.xlu0 %280
        %v284 = vlaneseq
        %v285 = vand.u32 %v284, 127
        %v286 = vlaneseq
        %v287 = vshrl.u32 %v286, 7
        %v288 = vsub.s32 %v285, %v287
        %v289 = vrot.slane %v278, %v288
        %v290 = vlaneseq
        %v291 = vshrl.u32 %v290, 7
        %v292 = vsub.s32 %v285, %v291
        %v293 = vrot.slane %v281, %v292
        %vm294 = vcmask 1041409
        %v295 = vsel %vm294, %v293, %v289
        %v297 = vadd.f32 %v274, %v295
        %vm298 = vcmask 25600
        %299 = vst.msk [vmem:[#allocation7] sm:$0x3] %vm298, %v297
        %p300 = scmp.eq.s32.totalorder %s26, 1
        // Predicated region
        $region53: #{tpu_custom_call.1} parent=39 // pred_check
          %p301 = pneg %p300
        $region54: #{tpu_custom_call.1} parent=39 // pred_check_branch
          %303 = sbr.rel (%p301) target = $region56
        $region55: #{tpu_custom_call.1} parent=39 // pred_region
          %v304 = vld [vmem:[#allocation7] sm:$0x3]
          %v305 = vmul.f32 %v304, 0.00390625
          %v306 = vld [vmem:[#allocation5] sm:$0xf]
          %v307 = vld [vmem:[%s2] sm:$0x1]
          %v309 = vlaneseq
          %v310 = vshrl.u32 %v309, 7
          %v311 = vsub.s32 0, %v310
          %v312 = vrot.slane %v307, %v311
          %vm314 = vcmask 31744
          %v316 = vsel %vm314, %v305, 0
          %v319 = vsel %vm275, %v306, 0
          %321 = vmatprep.subr.mxu0 0.0
          %322 = vmatpush1.msra.mxu0 %v319
          %323 = vmatprep.subr.mxu0 0.0
          %324 = vmatpush1.msra.mxu0 0.0
          %325 = vmatprep.subr.mxu0 0.0
          %326 = vmatpush1.msra.mxu0 0.0
          %327 = vmatprep.subr.mxu0 0.0
          %328 = vmatpush1.msra.mxu0 0.0
          %329 = vmatprep.subr.mxu0 0.0
          %330 = vmatpush1.msra.mxu0 0.0
          %331 = vmatprep.subr.mxu0 0.0
          %332 = vmatpush1.msra.mxu0 0.0
          %333 = vmatprep.subr.mxu0 0.0
          %334 = vmatpush1.msra.mxu0 0.0
          %335 = vmatprep.subr.mxu0 0.0
          %336 = vmatpush1.msra.mxu0 0.0
          %337 = vmatprep.subr.mxu0 0.0
          %338 = vmatpush1.msra.mxu0 0.0
          %339 = vmatprep.subr.mxu0 0.0
          %340 = vmatpush1.msra.mxu0 0.0
          %341 = vmatprep.subr.mxu0 0.0
          %342 = vmatpush1.msra.mxu0 0.0
          %343 = vmatprep.subr.mxu0 0.0
          %344 = vmatpush1.msra.mxu0 0.0
          %345 = vmatprep.subr.mxu0 0.0
          %346 = vmatpush1.msra.mxu0 0.0
          %347 = vmatprep.subr.mxu0 0.0
          %348 = vmatpush1.msra.mxu0 0.0
          %349 = vmatprep.subr.mxu0 0.0
          %350 = vmatpush1.msra.mxu0 0.0
          %351 = vmatprep.subr.mxu0 0.0
          %352 = vmatpush1.msra.mxu0 0.0
          %353 = vmatprep.subr.mxu0 0.0
          %354 = vmatpush1.msra.mxu0 0.0
          %355 = vmatprep.subr.mxu0 0.0
          %356 = vmatpush1.msra.mxu0 0.0
          %357 = vmatprep.subr.mxu0 0.0
          %358 = vmatpush1.msra.mxu0 0.0
          %359 = vmatprep.subr.mxu0 0.0
          %360 = vmatpush1.msra.mxu0 0.0
          %361 = vmatprep.subr.mxu0 0.0
          %362 = vmatpush1.msra.mxu0 0.0
          %363 = vmatprep.subr.mxu0 0.0
          %364 = vmatpush1.msra.mxu0 0.0
          %365 = vmatprep.subr.mxu0 0.0
          %366 = vmatpush1.msra.mxu0 0.0
          %367 = vmatprep.subr.mxu0 0.0
          %368 = vmatpush1.msra.mxu0 0.0
          %369 = vmatprep.subr.mxu0 0.0
          %370 = vmatpush1.msra.mxu0 0.0
          %371 = vmatprep.subr.mxu0 0.0
          %372 = vmatpush1.msra.mxu0 0.0
          %373 = vmatprep.subr.mxu0 0.0
          %374 = vmatpush1.msra.mxu0 0.0
          %375 = vmatprep.subr.mxu0 0.0
          %376 = vmatpush1.msra.mxu0 0.0
          %377 = vmatprep.subr.mxu0 0.0
          %378 = vmatpush1.msra.mxu0 0.0
          %379 = vmatprep.subr.mxu0 0.0
          %380 = vmatpush1.msra.mxu0 0.0
          %381 = vmatprep.subr.mxu0 0.0
          %382 = vmatpush1.msra.mxu0 0.0
          %383 = vmatprep.subr.mxu0 0.0
          %384 = vmatpush1.msra.mxu0 0.0
          %385 = vmatprep.mubr.f32.mxu0 0.0
          %386 = vmatmul.mubr.f32.gmra.mrb[0].mxu0 %v316
          %v387 = vpop.f32.mrb[0].mxu0
          %v388 = vadd.f32 %v312, %v387
          %v389 = vpop.f32.mrb[0].mxu0
          %390 = vdwg.mxu0
          %v391 = vmax.f32 %v388, 0.0
          %v392 = vld [vmem:[%s3] sm:$0xf]
          %v393 = vld [vmem:[%s4] sm:$0x1]
          %v395 = vlaneseq
          %v396 = vshrl.u32 %v395, 7
          %v397 = vsub.s32 0, %v396
          %v398 = vrot.slane %v393, %v397
          %v401 = vsel %vm314, %v391, 0
          %v404 = vsel %vm275, %v392, 0
          %406 = vmatprep.subr.mxu0 0.0
          %407 = vmatpush1.msra.mxu0 %v404
          %408 = vmatprep.subr.mxu0 0.0
          %409 = vmatpush1.msra.mxu0 0.0
          %410 = vmatprep.subr.mxu0 0.0
          %411 = vmatpush1.msra.mxu0 0.0
          %412 = vmatprep.subr.mxu0 0.0
          %413 = vmatpush1.msra.mxu0 0.0
          %414 = vmatprep.subr.mxu0 0.0
          %415 = vmatpush1.msra.mxu0 0.0
          %416 = vmatprep.subr.mxu0 0.0
          %417 = vmatpush1.msra.mxu0 0.0
          %418 = vmatprep.subr.mxu0 0.0
          %419 = vmatpush1.msra.mxu0 0.0
          %420 = vmatprep.subr.mxu0 0.0
          %421 = vmatpush1.msra.mxu0 0.0
          %422 = vmatprep.subr.mxu0 0.0
          %423 = vmatpush1.msra.mxu0 0.0
          %424 = vmatprep.subr.mxu0 0.0
          %425 = vmatpush1.msra.mxu0 0.0
          %426 = vmatprep.subr.mxu0 0.0
          %427 = vmatpush1.msra.mxu0 0.0
          %428 = vmatprep.subr.mxu0 0.0
          %429 = vmatpush1.msra.mxu0 0.0
          %430 = vmatprep.subr.mxu0 0.0
          %431 = vmatpush1.msra.mxu0 0.0
          %432 = vmatprep.subr.mxu0 0.0
          %433 = vmatpush1.msra.mxu0 0.0
          %434 = vmatprep.subr.mxu0 0.0
          %435 = vmatpush1.msra.mxu0 0.0
          %436 = vmatprep.subr.mxu0 0.0
          %437 = vmatpush1.msra.mxu0 0.0
          %438 = vmatprep.subr.mxu0 0.0
          %439 = vmatpush1.msra.mxu0 0.0
          %440 = vmatprep.subr.mxu0 0.0
          %441 = vmatpush1.msra.mxu0 0.0
          %442 = vmatprep.subr.mxu0 0.0
          %443 = vmatpush1.msra.mxu0 0.0
          %444 = vmatprep.subr.mxu0 0.0
          %445 = vmatpush1.msra.mxu0 0.0
          %446 = vmatprep.subr.mxu0 0.0
          %447 = vmatpush1.msra.mxu0 0.0
          %448 = vmatprep.subr.mxu0 0.0
          %449 = vmatpush1.msra.mxu0 0.0
          %450 = vmatprep.subr.mxu0 0.0
          %451 = vmatpush1.msra.mxu0 0.0
          %452 = vmatprep.subr.mxu0 0.0
          %453 = vmatpush1.msra.mxu0 0.0
          %454 = vmatprep.subr.mxu0 0.0
          %455 = vmatpush1.msra.mxu0 0.0
          %456 = vmatprep.subr.mxu0 0.0
          %457 = vmatpush1.msra.mxu0 0.0
          %458 = vmatprep.subr.mxu0 0.0
          %459 = vmatpush1.msra.mxu0 0.0
          %460 = vmatprep.subr.mxu0 0.0
          %461 = vmatpush1.msra.mxu0 0.0
          %462 = vmatprep.subr.mxu0 0.0
          %463 = vmatpush1.msra.mxu0 0.0
          %464 = vmatprep.subr.mxu0 0.0
          %465 = vmatpush1.msra.mxu0 0.0
          %466 = vmatprep.subr.mxu0 0.0
          %467 = vmatpush1.msra.mxu0 0.0
          %468 = vmatprep.subr.mxu0 0.0
          %469 = vmatpush1.msra.mxu0 0.0
          %470 = vmatprep.mubr.f32.mxu0 0.0
          %471 = vmatmul.mubr.f32.gmra.mrb[0].mxu0 %v401
          %v472 = vpop.f32.mrb[0].mxu0
          %v473 = vadd.f32 %v398, %v472
          %v474 = vpop.f32.mrb[0].mxu0
          %475 = vdwg.mxu0
          %476 = vst.msk [vmem:[#allocation7] sm:$0x3] %vm298, %v473
        $region56: #{tpu_custom_call.1} parent=39 // pred_fallthru
          _
        // Predicated region
        $region57: #{tpu_custom_call.1} parent=39 // pred_check
          %p477 = pneg %p163
        $region58: #{tpu_custom_call.1} parent=39 // pred_check_branch
          %479 = sbr.rel (%p477) target = $region60
        $region59: #{tpu_custom_call.1} parent=39 // pred_region
          %s481 = ssub.s32 32, 32
          %482 = vsyncadd [#allocation4], %s481
          %s483 = smul.addr %s25, 32
          %s484 = scalar_lea.hbm %s5, %s483
          %s486 = sshll.u32 [#allocation7], 4
          %s487 = int_to_ptr.vmem [resolvable:$true] %s486
          %489 = dma.vmem_to_hbm [thread:$0]  %s487, 32, %s484, [#allocation4]
        $region60: #{tpu_custom_call.1} parent=39 // pred_fallthru
          _
        // Predicated region
        $region61: #{tpu_custom_call.1} parent=39 // pred_check
          %p490 = pneg %p163
        $region62: #{tpu_custom_call.1} parent=39 // pred_check_branch
          %492 = sbr.rel (%p490) target = $region64
        $region63: #{tpu_custom_call.1} parent=39 // pred_region
          %493 = dma.done [#allocation4], 32
        $region64: #{tpu_custom_call.1} parent=39 // pred_fallthru
          _
      $region40: #{tpu_custom_call.1} parent=5 // pred_fallthru
        _
      %p494 = scmp.le.s32.totalorder 2, %s16
      // Predicated region
      $region65: #{tpu_custom_call.1} parent=5 // pred_check
        %p495 = pneg %p494
      $region66: #{tpu_custom_call.1} parent=5 // pred_check_branch
        %497 = sbr.rel (%p495) target = $region68
      $region67: #{tpu_custom_call.1} parent=5 // pred_region
        %s498 = ssub.s32 %s16, 2
      $region68: #{tpu_custom_call.1} parent=5 // pred_fallthru
        _
    $region6: #{tpu_custom_call.1} parent=1 // loop_footer
      %s20 = sadd.s32 1, %s16
    $region7: #{tpu_custom_call.1} parent=1 // loop_footer_branch
      %15 = sbr.rel target = $region3
    $region8: #{tpu_custom_call.1} parent=1 // loop_exit
      _
    %499 = vsyncpa [#allocation3], 1
    %s500 = scalar_lea.sflag [#allocation3], 1
    %501 = vsyncpa %s500, 1
    %502 = vsyncpa [#allocation6], 1
    %503 = vsyncpa [#allocation4], 1
    %s504 = scalar_lea.sflag [#allocation4], 1
    %505 = vsyncpa %s504, 1

</llo_original>
